<compile_context>
chip_gen: v5e
topology: v5e:2x2
jax: 0.10.0
libtpu: 0.0.40
codegen_flags: <defaults>
</compile_context>

<pallas_src>
import functools
import math

import jax
import jax.numpy as jnp
import numpy as np
from jax.experimental import pallas as pl
from jax.experimental.pallas import tpu as pltpu


def _seq_attention_kernel(q_ref, k_ref, v_ref, pe_ref, o_ref, *,
                          attn_span, hidden_size, q_tile):
    L = attn_span
    Tq = q_tile
    W = Tq + L                       # dense key-window width for this query tile

    # Window start inside the (M+L)-row key/value slab resident in VMEM.
    start = pl.program_id(1) * Tq
    if Tq % 8 == 0:
        start = pl.multiple_of(start, 8)      # sublane-aligned dynamic slice

    # Fold the 1/sqrt(H) scale into q once (both score terms are linear in q).
    inv_sqrt = 1.0 / math.sqrt(hidden_size)
    q = q_ref[0]                                                    # (Tq, H) native dtype
    qs = (q.astype(jnp.float32) * inv_sqrt).astype(q.dtype)

    kw = k_ref[0, pl.ds(start, W), :]                               # (W, H)
    vw = v_ref[0, pl.ds(start, W), :]                               # (W, H)
    pe = pe_ref[0]                                                  # (H, L)

    # ---- Content scores on the MXU (dense window coords): S[i, c] = qs_i . kw_c ----
    s = jnp.einsum("th,wh->tw", qs, kw, preferred_element_type=jnp.float32)   # (Tq, W)

    # ---- Positional scores on the MXU (band coords): G[i, j] = qs_i . pe[:, j] ----
    g = jnp.dot(qs, pe, preferred_element_type=jnp.float32)                   # (Tq, L)

    # ---- Skew G into dense window coords: pos[i, i + j] = G[i, j] ----
    # Pad to width W, then rotate row i right by i using a log2(Tq) binary decomposition of
    # static lane-rolls + per-row selects (robust for any W; for lane-aligned W this could be
    # a single pltpu.roll(gp, 0, axis=1, stride=1, stride_axis=0)).
    gp = jnp.concatenate([g, jnp.zeros((Tq, W - L), jnp.float32)], axis=-1)   # (Tq, W)
    row = jax.lax.broadcasted_iota(jnp.int32, (Tq, W), 0)
    x = gp
    for b in range(max(1, (Tq - 1).bit_length())):
        sft = 1 << b
        rolled = jnp.concatenate([x[:, W - sft:], x[:, :W - sft]], axis=-1)
        x = jnp.where((row & sft) != 0, rolled, x)
    pos = x                                                                   # (Tq, W)

    # ---- Band mask (before softmax!) + f32 softmax over the dense window ----
    col = jax.lax.broadcasted_iota(jnp.int32, (Tq, W), 1)
    valid = jnp.logical_and(col >= row, col < row + L)
    scores = jnp.where(valid, s + pos, -1e30)
    m = jnp.max(scores, axis=-1, keepdims=True)
    p = jnp.exp(scores - m)
    denom = jnp.sum(p, axis=-1, keepdims=True)
    probs = p * pl.reciprocal(denom, approx=True)     # masked entries are exactly 0
    # TODO(synk): nn.Dropout is identity in eval mode; no stochastic dropout applied here.
    # TODO(synk): AdaptiveSpan trimming/soft-masking (adapt_span_enabled=True path) not implemented.

    # ---- Output on the MXU: out[i] = sum_c probs[i, c] * vw[c]  (== _skew(attn) @ value) ----
    out = jnp.einsum("tw,wh->th", probs.astype(vw.dtype), vw,
                     preferred_element_type=jnp.float32)                      # (Tq, H)
    o_ref[0] = out.astype(o_ref.dtype)


def seq_attention(query, key, value, key_pe, *, attn_span):
    """query (B, M, H); key/value (B, M+attn_span, H); key_pe (1, H, attn_span)."""
    B, M, H = query.shape
    L = attn_span
    Lk = key.shape[1]
    assert Lk == M + L, "key/value length must be M + attn_span"
    assert value.shape == key.shape
    assert key_pe.shape == (1, H, L)

    # Query tile: 128 rows when it divides M (MXU/(8,128)-friendly), otherwise one tile of M rows.
    Tq = 128 if (M % 128 == 0) else M
    nq = M // Tq

    kernel = functools.partial(
        _seq_attention_kernel, attn_span=L, hidden_size=H, q_tile=Tq
    )
    return pl.pallas_call(
        kernel,
        out_shape=jax.ShapeDtypeStruct((B, M, H), query.dtype),
        grid=(B, nq),
        in_specs=[
            pl.BlockSpec((1, Tq, H), lambda b, qt: (b, qt, 0)),     # query tile
            pl.BlockSpec((1, Lk, H), lambda b, qt: (b, 0, 0)),      # key: resident per batch
            pl.BlockSpec((1, Lk, H), lambda b, qt: (b, 0, 0)),      # value: resident per batch
            pl.BlockSpec((1, H, L), lambda b, qt: (0, 0, 0)),       # key_pe (shared)
        ],
        out_specs=pl.BlockSpec((1, Tq, H), lambda b, qt: (b, qt, 0)),
        compiler_params=pltpu.CompilerParams(
            dimension_semantics=("parallel", "parallel"),
            vmem_limit_bytes=32 * 1024 * 1024,
        ),
    )(query, key, value, key_pe)


def seq_attention_reference(query, key, value, key_pe, *, attn_span):
    """Pure-JAX reference reproducing the PyTorch matmul/_unskew/_skew path."""
    B, M, H = query.shape
    L = attn_span
    attn_cont = jnp.einsum("bmh,bnh->bmn", query, key)                 # (B, M, M+L)
    idx = jnp.arange(M)[:, None] + jnp.arange(L)[None, :]              # unskew indices
    band = jnp.take_along_axis(attn_cont, jnp.broadcast_to(idx, (B, M, L)), axis=-1)
    attn_pos = jnp.einsum("bmh,hl->bml", query, key_pe[0])
    attn = jax.nn.softmax((band + attn_pos) / math.sqrt(H), axis=-1)
    out = jnp.zeros_like(query)
    for j in range(L):                                                 # skew + matmul(value)
        out = out + attn[:, :, j:j + 1] * value[:, j:j + M, :]
    return out


if __name__ == "__main__":
    B, M, H = 2, 8, 32          # batch, query length, hidden_size
    ATTN_SPAN = 8               # attn_span
    LK = M + ATTN_SPAN          # key/value length

    root = jax.random.PRNGKey(0)
    kq, kk, kv, kp = jax.random.split(root, 4)
    query = jax.random.normal(kq, (B, M, H), dtype=jnp.float32)
    key = jax.random.normal(kk, (B, LK, H), dtype=jnp.float32)
    value = jax.random.normal(kv, (B, LK, H), dtype=jnp.float32)
    # key_pe is the learned positional parameter of shape (1, hidden_size, attn_span).
    key_pe = 0.02 * jax.random.normal(kp, (1, H, ATTN_SPAN), dtype=jnp.float32)

    out = seq_attention(query, key, value, key_pe, attn_span=ATTN_SPAN)
    out = jax.block_until_ready(out)

    ref = seq_attention_reference(query, key, value, key_pe, attn_span=ATTN_SPAN)
    # Tolerance is loosened slightly because the softmax normalization uses the EUP's
    # approximate reciprocal (pl.reciprocal(..., approx=True)); band/skew indexing errors
    # would show up as O(0.1+) deviations and still be caught.
    np.testing.assert_allclose(np.asarray(out), np.asarray(ref), rtol=1e-2, atol=1e-2)

    print("KERNEL_OK")
</pallas_src>

<mosaic_0001>
module attributes {stable_mosaic.version = 11 : i64} {
  func.func @_seq_attention_kernel(%arg0: i32, %arg1: i32, %arg2: memref<1x8x32xf32, #tpu.memory_space<vmem>>, %arg3: memref<1x16x32xf32, #tpu.memory_space<vmem>>, %arg4: memref<1x16x32xf32, #tpu.memory_space<vmem>>, %arg5: memref<1x32x8xf32, #tpu.memory_space<vmem>>, %arg6: memref<1x8x32xf32, #tpu.memory_space<vmem>>) attributes {dimension_semantics = [#tpu.dimension_semantics<parallel>, #tpu.dimension_semantics<parallel>], iteration_bounds = array<i64: 2, 1>, scalar_prefetch = 0 : i64, scratch_operands = 0 : i64, tpu.core_type = #tpu.core_type<tc>, window_params = [{transform_indices = @transform_0, window_bounds = array<i64: 1, 8, 32>}, {transform_indices = @transform_1, window_bounds = array<i64: 1, 16, 32>}, {transform_indices = @transform_2, window_bounds = array<i64: 1, 16, 32>}, {pipeline_mode = #tpu.pipeline_mode<synchronous>, transform_indices = @transform_3, window_bounds = array<i64: 1, 32, 8>}, {transform_indices = @transform_4, window_bounds = array<i64: 1, 8, 32>}]} {
    %c8_i32 = arith.constant 8 : i32
    %0 = arith.muli %arg1, %c8_i32 : i32
    %1 = tpu.assume_multiple %0, 8 : i32
    %c0 = arith.constant 0 : index
    %c0_0 = arith.constant 0 : index
    %c0_1 = arith.constant 0 : index
    %2 = vector.load %arg2[%c0, %c0_0, %c0_1] : memref<1x8x32xf32, #tpu.memory_space<vmem>>, vector<1x8x32xf32>
    %3 = vector.shape_cast %2 : vector<1x8x32xf32> to vector<8x32xf32>
    %cst = arith.constant 0.176776692 : f32
    %4 = vector.broadcast %cst : f32 to vector<8x32xf32>
    %5 = arith.mulf %3, %4 : vector<8x32xf32>
    %c0_2 = arith.constant 0 : index
    %6 = arith.index_cast %1 : i32 to index
    %c0_3 = arith.constant 0 : index
    %7 = vector.load %arg3[%c0_2, %6, %c0_3] : memref<1x16x32xf32, #tpu.memory_space<vmem>>, vector<1x16x32xf32>
    %8 = vector.shape_cast %7 : vector<1x16x32xf32> to vector<16x32xf32>
    %c0_4 = arith.constant 0 : index
    %9 = arith.index_cast %1 : i32 to index
    %c0_5 = arith.constant 0 : index
    %10 = vector.load %arg4[%c0_4, %9, %c0_5] : memref<1x16x32xf32, #tpu.memory_space<vmem>>, vector<1x16x32xf32>
    %11 = vector.shape_cast %10 : vector<1x16x32xf32> to vector<16x32xf32>
    %c0_6 = arith.constant 0 : index
    %c0_7 = arith.constant 0 : index
    %c0_8 = arith.constant 0 : index
    %12 = vector.load %arg5[%c0_6, %c0_7, %c0_8] : memref<1x32x8xf32, #tpu.memory_space<vmem>>, vector<1x32x8xf32>
    %13 = vector.shape_cast %12 : vector<1x32x8xf32> to vector<32x8xf32>
    "tpu.trace_start"() <{level = 10 : i32, message = "th,wh->tw"}> : () -> ()
    %cst_9 = arith.constant dense<0.000000e+00> : vector<8x16xf32>
    %14 = tpu.matmul %5, %8, %cst_9 {dimension_numbers = #tpu.dot_dimension_numbers<[1], [1], [0], [0], [0, 0, 1, 0], [], []>} : vector<8x32xf32>, vector<16x32xf32>, vector<8x16xf32> -> vector<8x16xf32>
    "tpu.trace_stop"() : () -> ()
    %cst_10 = arith.constant dense<0.000000e+00> : vector<8x8xf32>
    %15 = tpu.matmul %5, %13, %cst_10 {dimension_numbers = #tpu.dot_dimension_numbers<[1], [0], [0], [1], [0, 0, 1, 1], [], []>} : vector<8x32xf32>, vector<32x8xf32>, vector<8x8xf32> -> vector<8x8xf32>
    %cst_11 = arith.constant 0.000000e+00 : f32
    %16 = vector.broadcast %cst_11 : f32 to vector<8x8xf32>
    %17 = tpu.concatenate %15, %16 in 1 : vector<8x8xf32>, vector<8x8xf32> -> vector<8x16xf32>
    %18 = tpu.iota {dimensions = array<i32: 0>} : vector<8x16xi32>
    %19 = vector.extract_strided_slice %17 {offsets = [0, 15], sizes = [8, 1], strides = [1, 1]} : vector<8x16xf32> to vector<8x1xf32>
    %20 = vector.extract_strided_slice %17 {offsets = [0, 0], sizes = [8, 15], strides = [1, 1]} : vector<8x16xf32> to vector<8x15xf32>
    %21 = tpu.concatenate %19, %20 in 1 : vector<8x1xf32>, vector<8x15xf32> -> vector<8x16xf32>
    %c1_i32 = arith.constant 1 : i32
    %22 = vector.broadcast %c1_i32 : i32 to vector<8x16xi32>
    %23 = arith.andi %18, %22 : vector<8x16xi32>
    %c0_i32 = arith.constant 0 : i32
    %24 = vector.broadcast %c0_i32 : i32 to vector<8x16xi32>
    %25 = arith.cmpi ne, %23, %24 : vector<8x16xi32>
    %26 = arith.select %25, %21, %17 : vector<8x16xi1>, vector<8x16xf32>
    %27 = vector.extract_strided_slice %26 {offsets = [0, 14], sizes = [8, 2], strides = [1, 1]} : vector<8x16xf32> to vector<8x2xf32>
    %28 = vector.extract_strided_slice %26 {offsets = [0, 0], sizes = [8, 14], strides = [1, 1]} : vector<8x16xf32> to vector<8x14xf32>
    %29 = tpu.concatenate %27, %28 in 1 : vector<8x2xf32>, vector<8x14xf32> -> vector<8x16xf32>
    %c2_i32 = arith.constant 2 : i32
    %30 = vector.broadcast %c2_i32 : i32 to vector<8x16xi32>
    %31 = arith.andi %18, %30 : vector<8x16xi32>
    %c0_i32_12 = arith.constant 0 : i32
    %32 = vector.broadcast %c0_i32_12 : i32 to vector<8x16xi32>
    %33 = arith.cmpi ne, %31, %32 : vector<8x16xi32>
    %34 = arith.select %33, %29, %26 : vector<8x16xi1>, vector<8x16xf32>
    %35 = vector.extract_strided_slice %34 {offsets = [0, 12], sizes = [8, 4], strides = [1, 1]} : vector<8x16xf32> to vector<8x4xf32>
    %36 = vector.extract_strided_slice %34 {offsets = [0, 0], sizes = [8, 12], strides = [1, 1]} : vector<8x16xf32> to vector<8x12xf32>
    %37 = tpu.concatenate %35, %36 in 1 : vector<8x4xf32>, vector<8x12xf32> -> vector<8x16xf32>
    %c4_i32 = arith.constant 4 : i32
    %38 = vector.broadcast %c4_i32 : i32 to vector<8x16xi32>
    %39 = arith.andi %18, %38 : vector<8x16xi32>
    %c0_i32_13 = arith.constant 0 : i32
    %40 = vector.broadcast %c0_i32_13 : i32 to vector<8x16xi32>
    %41 = arith.cmpi ne, %39, %40 : vector<8x16xi32>
    %42 = arith.select %41, %37, %34 : vector<8x16xi1>, vector<8x16xf32>
    %43 = tpu.iota {dimensions = array<i32: 1>} : vector<8x16xi32>
    %44 = arith.cmpi sge, %43, %18 : vector<8x16xi32>
    %c8_i32_14 = arith.constant 8 : i32
    %45 = vector.broadcast %c8_i32_14 : i32 to vector<8x16xi32>
    %46 = arith.addi %18, %45 : vector<8x16xi32>
    %47 = arith.cmpi slt, %43, %46 : vector<8x16xi32>
    %48 = arith.andi %44, %47 : vector<8x16xi1>
    %49 = arith.addf %14, %42 : vector<8x16xf32>
    %cst_15 = arith.constant -1.000000e+30 : f32
    %50 = vector.broadcast %cst_15 : f32 to vector<8x16xf32>
    %51 = arith.select %48, %49, %50 : vector<8x16xi1>, vector<8x16xf32>
    %cst_16 = arith.constant dense<0xFF800000> : vector<8xf32>
    %52 = vector.multi_reduction <maximumf>, %51, %cst_16 [1] : vector<8x16xf32> to vector<8xf32>
    %53 = vector.shape_cast %52 : vector<8xf32> to vector<8x1xf32>
    %54 = vector.broadcast %53 : vector<8x1xf32> to vector<8x16xf32>
    %55 = arith.subf %51, %54 : vector<8x16xf32>
    %56 = math.exp %55 : vector<8x16xf32>
    %cst_17 = arith.constant dense<0.000000e+00> : vector<8xf32>
    %57 = vector.multi_reduction <add>, %56, %cst_17 [1] : vector<8x16xf32> to vector<8xf32>
    %58 = vector.shape_cast %57 : vector<8xf32> to vector<8x1xf32>
    %59 = tpu.reciprocal %58 {approx = true} : vector<8x1xf32> -> vector<8x1xf32>
    %60 = vector.broadcast %59 : vector<8x1xf32> to vector<8x16xf32>
    %61 = arith.mulf %56, %60 : vector<8x16xf32>
    "tpu.trace_start"() <{level = 10 : i32, message = "tw,wh->th"}> : () -> ()
    %cst_18 = arith.constant dense<0.000000e+00> : vector<8x32xf32>
    %62 = tpu.matmul %61, %11, %cst_18 {dimension_numbers = #tpu.dot_dimension_numbers<[1], [0], [0], [1], [0, 0, 1, 1], [], []>} : vector<8x16xf32>, vector<16x32xf32>, vector<8x32xf32> -> vector<8x32xf32>
    "tpu.trace_stop"() : () -> ()
    %c0_19 = arith.constant 0 : index
    %c0_20 = arith.constant 0 : index
    %c0_21 = arith.constant 0 : index
    %63 = vector.load %arg6[%c0_19, %c0_20, %c0_21] : memref<1x8x32xf32, #tpu.memory_space<vmem>>, vector<1x8x32xf32>
    %64 = vector.shape_cast %63 : vector<1x8x32xf32> to vector<8x32xf32>
    %65 = vector.shape_cast %62 : vector<8x32xf32> to vector<1x8x32xf32>
    tpu.vector_store %arg6[%c0_19, %c0_20, %c0_21], %65 {strides = array<i32>} : memref<1x8x32xf32, #tpu.memory_space<vmem>>, vector<1x8x32xf32>,
    return
  }
  func.func @transform_0(%arg0: i32, %arg1: i32) -> (i32, i32, i32) {
    %c0_i32 = arith.constant 0 : i32
    %c0_i32_0 = arith.constant 0 : i32
    return %arg0, %arg1, %c0_i32 : i32, i32, i32
  }
  func.func @transform_1(%arg0: i32, %arg1: i32) -> (i32, i32, i32) {
    %c0_i32 = arith.constant 0 : i32
    %c0_i32_0 = arith.constant 0 : i32
    %c0_i32_1 = arith.constant 0 : i32
    return %arg0, %c0_i32, %c0_i32_0 : i32, i32, i32
  }
  func.func @transform_2(%arg0: i32, %arg1: i32) -> (i32, i32, i32) {
    %c0_i32 = arith.constant 0 : i32
    %c0_i32_0 = arith.constant 0 : i32
    %c0_i32_1 = arith.constant 0 : i32
    return %arg0, %c0_i32, %c0_i32_0 : i32, i32, i32
  }
  func.func @transform_3(%arg0: i32, %arg1: i32) -> (i32, i32, i32) {
    %c0_i32 = arith.constant 0 : i32
    %c0_i32_0 = arith.constant 0 : i32
    %c0_i32_1 = arith.constant 0 : i32
    %c0_i32_2 = arith.constant 0 : i32
    return %c0_i32, %c0_i32_0, %c0_i32_1 : i32, i32, i32
  }
  func.func @transform_4(%arg0: i32, %arg1: i32) -> (i32, i32, i32) {
    %c0_i32 = arith.constant 0 : i32
    %c0_i32_0 = arith.constant 0 : i32
    return %arg0, %arg1, %c0_i32 : i32, i32, i32
  }
}

</mosaic_0001>

<llo_original>
// kernel: tpu_custom_call.1
$region0: #{tpu_custom_call.1}
  #allocation0 [shape = 'u32[]', space=smem, size = 0x4, offset = 0x4, fixed_abs, tag = 'smem constant byte address 0x4 - core index']
  #allocation1 [shape = 'u32[72,128]{1,0:T(1,128)}', space=vmem, size = 0x9000, scoped, tag = 'internal scratch']
  %s0 = inlined_call_operand.hbm [shape: f32[2,8,32], index: 0, kind: input, shape index: {}]
  %s1 = inlined_call_operand.vmem [shape: f32[2,16,32], index: 1, kind: input, shape index: {}]
  %s2 = inlined_call_operand.hbm [shape: f32[2,16,32], index: 2, kind: input, shape index: {}]
  %s3 = inlined_call_operand.vmem [shape: f32[1,32,8], index: 3, kind: input, shape index: {}]
  %s4 = inlined_call_operand.hbm [shape: f32[2,8,32], index: 4, kind: output, shape index: {}]
  %s5 = sld [smem:[#allocation0]]
  $region57: #{tpu_custom_call.1} parent=0
    _
  %s7 = ssub.s32 1, %s5
  %s8 = scalar_select 0, %s7, %s5
  $region1: #{tpu_custom_call.1} parent=0
    #allocation2 [shape = 'u8[8192]{0}', space=vmem, size = 0x2000, scoped, tag = 'input window, operand 0']
    #allocation3 [shape = 's32[2]{0}', space=sflag, size = 0x8, scoped, tag = 'scoped memory for tpu_custom_call.1']
    #allocation4 [shape = 's32[2]{0}', space=sflag, size = 0x8, scoped, tag = 'scoped memory for tpu_custom_call.1']
    #allocation5 [shape = 'u8[16384]{0}', space=vmem, size = 0x4000, scoped, tag = 'input window, operand 2']
    #allocation6 [shape = 's32[2]{0}', space=sflag, size = 0x8, scoped, tag = 'scoped memory for tpu_custom_call.1']
    #allocation7 [shape = 'u8[8192]{0}', space=vmem, size = 0x2000, scoped, tag = 'output window, operand 0']
    %9 = vsyncpa [#allocation3], 0
    %s10 = scalar_lea.sflag [#allocation3], 1
    %11 = vsyncpa %s10, 0
    %12 = vsyncpa [#allocation6], 0
    %s13 = scalar_lea.sflag [#allocation6], 1
    %14 = vsyncpa %s13, 0
    %15 = vsyncpa [#allocation4], 0
    %s16 = scalar_lea.sflag [#allocation4], 1
    %17 = vsyncpa %s16, 0
    loop: start=0, step=1, limit=4
    $region2: #{tpu_custom_call.1} parent=1 // loop_pre_header
      _
    $region3: #{tpu_custom_call.1} parent=1 // loop_header
      %s19 = sphi 0, %s23
      %p20 = scmp.ge.s32.totalorder %s19, 4
      %s26 = sphi 0, %s38
      %s27 = sphi 0, %s34
      %s28 = sphi 0, %s26
      %s29 = sphi 0, %s27
      %s30 = sphi 0, %s28
      %s31 = sphi 0, %s29
      %s43 = sphi 0, %s45
      %s46 = sphi 0, %s43
      %s47 = sphi 0, %s46
      %s63 = sphi 0, %s47
      %s69 = sphi 0, %s71
      %s72 = sphi 0, %s69
      %s73 = sphi 0, %s72
      %s89 = sphi 0, %s73
      %s95 = sphi 0, %s97
      %s98 = sphi 0, %s95
      %s99 = sphi 0, %s98
      %s115 = sphi 0, %s99
      %s119 = sphi 0, %s119
      %s121 = sphi 0, %s119
      %s122 = sphi 0, %s121
      %s136 = sphi 0, %s122
      %s144 = sphi 0, %s146
      %s147 = sphi 0, %s144
      %s148 = sphi 0, %s147
      %s164 = sphi 0, %s148
    $region4: #{tpu_custom_call.1} parent=1 // loop_header_branch
      %22 = sbr.rel (%p20) target = $region8
    $region5: #{tpu_custom_call.1} parent=1 // loop_body
      %s24 = ssub.s32 %s19, 1
      %s25 = ssub.s32 %s19, 2
      %s32 = sadd.s32 1, %s27
      %p33 = scmp.ge.s32.totalorder %s32, 1
      %s34 = scalar_select %p33, 0, %s32
      %s35 = sadd.s32 1, %s26
      %s36 = scalar_select %p33, %s35, %s26
      %p37 = scmp.ge.s32.totalorder %s36, 2
      %s38 = scalar_select %p37, 0, %s36
      %s39 = ssub.s32 %s26, %s38
      %s40 = ssub.s32 %s27, %s34
      %s41 = sor.u32 %s39, %s40
      %p42 = scmp.eq.s32.totalorder %s41, 0
      %s44 = sadd.s32 %s43, 1
      %s45 = scalar_select %p42, %s43, %s44
      %p48 = pneg %p42
      %p49 = scmp.eq.s32.totalorder %s19, 1
      %p50 = por %p48, %p49
      %p51 = scmp.ne.s32.totalorder %s43, %s46
      %p52 = scmp.eq.s32.totalorder %s19, 0
      %p53 = por %p51, %p52
      %p54 = scmp.ne.s32.totalorder %s43, %s46
      %p55 = scmp.eq.s32.totalorder %s24, 1
      %p56 = por %p54, %p55
      %p57 = scmp.ne.s32.totalorder %s46, %s47
      %p58 = scmp.eq.s32.totalorder %s24, 0
      %p59 = por %p57, %p58
      %p60 = scmp.ne.s32.totalorder %s46, %s47
      %p61 = scmp.eq.s32.totalorder %s25, 1
      %p62 = por %p60, %p61
      %p64 = scmp.ne.s32.totalorder %s47, %s63
      %p65 = scmp.eq.s32.totalorder %s25, 0
      %p66 = por %p64, %p65
      %s67 = ssub.s32 %s26, %s38
      %p68 = scmp.eq.s32.totalorder %s67, 0
      %s70 = sadd.s32 %s69, 1
      %s71 = scalar_select %p68, %s69, %s70
      %p74 = pneg %p68
      %p75 = scmp.eq.s32.totalorder %s19, 1
      %p76 = por %p74, %p75
      %p77 = scmp.ne.s32.totalorder %s69, %s72
      %p78 = scmp.eq.s32.totalorder %s19, 0
      %p79 = por %p77, %p78
      %p80 = scmp.ne.s32.totalorder %s69, %s72
      %p81 = scmp.eq.s32.totalorder %s24, 1
      %p82 = por %p80, %p81
      %p83 = scmp.ne.s32.totalorder %s72, %s73
      %p84 = scmp.eq.s32.totalorder %s24, 0
      %p85 = por %p83, %p84
      %p86 = scmp.ne.s32.totalorder %s72, %s73
      %p87 = scmp.eq.s32.totalorder %s25, 1
      %p88 = por %p86, %p87
      %p90 = scmp.ne.s32.totalorder %s73, %s89
      %p91 = scmp.eq.s32.totalorder %s25, 0
      %p92 = por %p90, %p91
      %s93 = ssub.s32 %s26, %s38
      %p94 = scmp.eq.s32.totalorder %s93, 0
      %s96 = sadd.s32 %s95, 1
      %s97 = scalar_select %p94, %s95, %s96
      %p100 = pneg %p94
      %p101 = scmp.eq.s32.totalorder %s19, 1
      %p102 = por %p100, %p101
      %p103 = scmp.ne.s32.totalorder %s95, %s98
      %p104 = scmp.eq.s32.totalorder %s19, 0
      %p105 = por %p103, %p104
      %p106 = scmp.ne.s32.totalorder %s95, %s98
      %p107 = scmp.eq.s32.totalorder %s24, 1
      %p108 = por %p106, %p107
      %p109 = scmp.ne.s32.totalorder %s98, %s99
      %p110 = scmp.eq.s32.totalorder %s24, 0
      %p111 = por %p109, %p110
      %p112 = scmp.ne.s32.totalorder %s98, %s99
      %p113 = scmp.eq.s32.totalorder %s25, 1
      %p114 = por %p112, %p113
      %p116 = scmp.ne.s32.totalorder %s99, %s115
      %p117 = scmp.eq.s32.totalorder %s25, 0
      %p118 = por %p116, %p117
      %s120 = sadd.s32 %s119, 1
      %p123 = scmp.eq.s32.totalorder %s19, 1
      %p124 = scmp.ne.s32.totalorder %s119, %s121
      %p125 = scmp.eq.s32.totalorder %s19, 0
      %p126 = por %p124, %p125
      %p127 = scmp.ne.s32.totalorder %s119, %s121
      %p128 = scmp.eq.s32.totalorder %s24, 1
      %p129 = por %p127, %p128
      %p130 = scmp.ne.s32.totalorder %s121, %s122
      %p131 = scmp.eq.s32.totalorder %s24, 0
      %p132 = por %p130, %p131
      %p133 = scmp.ne.s32.totalorder %s121, %s122
      %p134 = scmp.eq.s32.totalorder %s25, 1
      %p135 = por %p133, %p134
      %p137 = scmp.ne.s32.totalorder %s122, %s136
      %p138 = scmp.eq.s32.totalorder %s25, 0
      %p139 = por %p137, %p138
      %s140 = ssub.s32 %s26, %s38
      %s141 = ssub.s32 %s27, %s34
      %s142 = sor.u32 %s140, %s141
      %p143 = scmp.eq.s32.totalorder %s142, 0
      %s145 = sadd.s32 %s144, 1
      %s146 = scalar_select %p143, %s144, %s145
      %p149 = pneg %p143
      %p150 = scmp.eq.s32.totalorder %s19, 1
      %p151 = por %p149, %p150
      %p152 = scmp.ne.s32.totalorder %s144, %s147
      %p153 = scmp.eq.s32.totalorder %s19, 0
      %p154 = por %p152, %p153
      %p155 = scmp.ne.s32.totalorder %s144, %s147
      %p156 = scmp.eq.s32.totalorder %s24, 1
      %p157 = por %p155, %p156
      %p158 = scmp.ne.s32.totalorder %s147, %s148
      %p159 = scmp.eq.s32.totalorder %s24, 0
      %p160 = por %p158, %p159
      %p161 = scmp.ne.s32.totalorder %s147, %s148
      %p162 = scmp.eq.s32.totalorder %s25, 1
      %p163 = por %p161, %p162
      %p165 = scmp.ne.s32.totalorder %s148, %s164
      %p166 = scmp.eq.s32.totalorder %s25, 0
      %p167 = por %p165, %p166
      %p168 = scmp.le.s32.totalorder 1, %s19
      %p169 = scmp.lt.s32.totalorder %s19, 3
      %p170 = pnand %p168, %p169
      %p171 = pneg %p170
      // Predicated region
      $region9: #{tpu_custom_call.1} parent=5 // pred_check
        _
      $region10: #{tpu_custom_call.1} parent=5 // pred_check_branch
        %173 = sbr.rel (%p170) target = $region12
      $region11: #{tpu_custom_call.1} parent=5 // pred_region
        %s174 = ssub.s32 %s19, 1
        // Predicated region
        $region13: #{tpu_custom_call.1} parent=11 // pred_check
          %p175 = pneg %p132
        $region14: #{tpu_custom_call.1} parent=11 // pred_check_branch
          %177 = sbr.rel (%p175) target = $region16
        $region15: #{tpu_custom_call.1} parent=11 // pred_region
          _
        $region16: #{tpu_custom_call.1} parent=11 // pred_fallthru
          _
      $region12: #{tpu_custom_call.1} parent=5 // pred_fallthru
        _
      %p178 = scmp.lt.s32.totalorder %s19, 2
      // Predicated region
      $region17: #{tpu_custom_call.1} parent=5 // pred_check
        %p179 = pneg %p178
      $region18: #{tpu_custom_call.1} parent=5 // pred_check_branch
        %181 = sbr.rel (%p179) target = $region20
      $region19: #{tpu_custom_call.1} parent=5 // pred_region
        // Predicated region
        $region21: #{tpu_custom_call.1} parent=19 // pred_check
          %p182 = pneg %p53
        $region22: #{tpu_custom_call.1} parent=19 // pred_check_branch
          %184 = sbr.rel (%p182) target = $region24
        $region23: #{tpu_custom_call.1} parent=19 // pred_region
          %s185 = sand.u32 %s43, 1
          %s186 = scalar_lea.sflag [#allocation3], %s185
          %s187 = sand.u32 %s43, 1
          %s188 = smul.addr %s187, 8
          %s189 = scalar_lea.vmem [#allocation2], %s188
          %191 = vsyncadd %s186, 0
          %s192 = sadd.s32 %s27, %s26
          %s193 = smul.addr %s192, 8
          %s194 = scalar_lea.hbm %s0, %s193
          %s196 = sshll.u32 %s194, 4
          %s197 = int_to_ptr.hbm [resolvable:$true] %s196
          %s198 = sshll.u32 %s189, 4
          %s199 = int_to_ptr.vmem [resolvable:$true] %s198
          %201 = dma.hbm_to_vmem [thread:$0]  %s197, 128, %s199, %s186
        $region24: #{tpu_custom_call.1} parent=19 // pred_fallthru
          _
        // Predicated region
        $region25: #{tpu_custom_call.1} parent=19 // pred_check
          %p202 = pneg %p79
        $region26: #{tpu_custom_call.1} parent=19 // pred_check_branch
          %204 = sbr.rel (%p202) target = $region28
        $region27: #{tpu_custom_call.1} parent=19 // pred_region
          %p205 = scmp.lt.s32.totalorder %s26, 1
          %s206 = scalar_select %p205, %s26, 1
          %s207 = smul.addr %s206, 2
          %s208 = smul.addr %s207, 8
          %s209 = scalar_lea.vmem %s1, %s208
        $region28: #{tpu_custom_call.1} parent=19 // pred_fallthru
          _
        // Predicated region
        $region29: #{tpu_custom_call.1} parent=19 // pred_check
          %p210 = pneg %p105
        $region30: #{tpu_custom_call.1} parent=19 // pred_check_branch
          %212 = sbr.rel (%p210) target = $region32
        $region31: #{tpu_custom_call.1} parent=19 // pred_region
          %s213 = sand.u32 %s95, 1
          %s214 = scalar_lea.sflag [#allocation6], %s213
          %s215 = sand.u32 %s95, 1
          %s216 = smul.addr %s215, 16
          %s217 = scalar_lea.vmem [#allocation5], %s216
          %219 = vsyncadd %s214, 0
          %s220 = smul.addr %s26, 2
          %s221 = smul.addr %s220, 8
          %s222 = scalar_lea.hbm %s2, %s221
          %s223 = sshll.u32 %s222, 4
          %s224 = int_to_ptr.hbm [resolvable:$true] %s223
          %s225 = sshll.u32 %s217, 4
          %s226 = int_to_ptr.vmem [resolvable:$true] %s225
          %231 = dma.hbm_to_vmem [thread:$0]  %s224, 256, %s226, %s214, 128, 128, 8
        $region32: #{tpu_custom_call.1} parent=19 // pred_fallthru
          _
      $region20: #{tpu_custom_call.1} parent=5 // pred_fallthru
        _
      %p232 = scmp.le.s32.totalorder 1, %s19
      %p233 = scmp.lt.s32.totalorder %s19, 3
      %p234 = pnand %p232, %p233
      %p235 = pneg %p234
      // Predicated region
      $region33: #{tpu_custom_call.1} parent=5 // pred_check
        _
      $region34: #{tpu_custom_call.1} parent=5 // pred_check_branch
        %237 = sbr.rel (%p234) target = $region36
      $region35: #{tpu_custom_call.1} parent=5 // pred_region
        %s238 = ssub.s32 %s19, 1
        %s239 = sand.u32 %s46, 1
        %s240 = scalar_lea.sflag [#allocation3], %s239
        %s241 = sand.u32 %s46, 1
        %s242 = smul.addr %s241, 8
        %s243 = scalar_lea.vmem [#allocation2], %s242
        // Predicated region
        $region37: #{tpu_custom_call.1} parent=35 // pred_check
          %p244 = pneg %p59
        $region38: #{tpu_custom_call.1} parent=35 // pred_check_branch
          %246 = sbr.rel (%p244) target = $region40
        $region39: #{tpu_custom_call.1} parent=35 // pred_region
          %248 = dma.done %s240, 128
        $region40: #{tpu_custom_call.1} parent=35 // pred_fallthru
          _
        %s249 = sand.u32 %s98, 1
        %s250 = scalar_lea.sflag [#allocation6], %s249
        %s251 = sand.u32 %s98, 1
        %s252 = smul.addr %s251, 16
        %s253 = scalar_lea.vmem [#allocation5], %s252
        // Predicated region
        $region41: #{tpu_custom_call.1} parent=35 // pred_check
          %p254 = pneg %p111
        $region42: #{tpu_custom_call.1} parent=35 // pred_check_branch
          %256 = sbr.rel (%p254) target = $region44
        $region43: #{tpu_custom_call.1} parent=35 // pred_region
          %258 = dma.done %s250, 256
        $region44: #{tpu_custom_call.1} parent=35 // pred_fallthru
          _
        %s259 = sand.u32 %s46, 1
        %s260 = scalar_lea.sflag [#allocation3], %s259
        %s261 = sand.u32 %s46, 1
        %s262 = smul.addr %s261, 8
        %s263 = scalar_lea.vmem [#allocation2], %s262
        %p264 = pneg %p59
        %p265 = pneg %p56
        %p266 = scmp.lt.s32.totalorder %s28, 1
        %s267 = scalar_select %p266, %s28, 1
        %s268 = smul.addr %s267, 2
        %s269 = smul.addr %s268, 8
        %s270 = scalar_lea.vmem %s1, %s269
        %p271 = pneg %p85
        %p272 = pneg %p82
        %s273 = sand.u32 %s98, 1
        %s274 = scalar_lea.sflag [#allocation6], %s273
        %s275 = sand.u32 %s98, 1
        %s276 = smul.addr %s275, 16
        %s277 = scalar_lea.vmem [#allocation5], %s276
        %p278 = pneg %p111
        %p279 = pneg %p108
        %p280 = pneg %p132
        %p281 = pneg %p129
        %p282 = pneg %p160
        %p283 = pneg %p157
        %s284 = sand.u32 %s147, 1
        %s285 = scalar_lea.sflag [#allocation4], %s284
        %s286 = sand.u32 %s147, 1
        %s287 = smul.addr %s286, 8
        %s288 = scalar_lea.vmem [#allocation7], %s287
        %p289 = scmp.lt.s32.totalorder %s28, 1
        %s290 = scalar_select %p289, %s28, 1
        %s291 = smul.addr %s290, 2
        %s292 = smul.addr %s291, 8
        %s293 = scalar_lea.vmem %s1, %s292
        %s294 = smul.u32 %s29, 8
        %v295 = vld [vmem:[%s243] sm:$0xff]
        %v296 = vmul.f32 %v295, 0.17677669
        %s297 = scalar_lea.vmem %s293, %s294
        %v298 = vld [vmem:[%s297] sm:$0xff]
        %v299 = vld [vmem:[%s297 + $0x8] sm:$0xff]
        %s300 = scalar_lea.vmem %s253, %s294 [#allocation5]
        %v301 = vld [vmem:[%s300] sm:$0xff]
        %v302 = vld [vmem:[%s300 + $0x8] sm:$0xff]
        %v303 = vld [vmem:[%s3] sm:$0xff]
        %v304 = vld [vmem:[%s3 + $0x8] sm:$0xff]
        %v305 = vld [vmem:[%s3 + $0x10] sm:$0xff]
        %v306 = vld [vmem:[%s3 + $0x18] sm:$0xff]
        %vm307 = vcmask 261120
        %v309 = vsel %vm307, %v296, 0
        %311 = vmatpush.msra.mxu0 0.0
        %312 = vmatpush.msra.mxu0 0.0
        %313 = vmatpush.msra.mxu0 0.0
        %314 = vmatpush.msra.mxu0 0.0
        %315 = vmatpush.msra.mxu0 0.0
        %316 = vmatpush.msra.mxu0 0.0
        %317 = vmatpush.msra.mxu0 0.0
        %318 = vmatpush.msra.mxu0 0.0
        %319 = vmatpush.msra.mxu0 0.0
        %320 = vmatpush.msra.mxu0 0.0
        %321 = vmatpush.msra.mxu0 0.0
        %322 = vmatpush.msra.mxu0 0.0
        %323 = vmatpush.msra.mxu0 %v306
        %324 = vmatpush.msra.mxu0 %v305
        %325 = vmatpush.msra.mxu0 %v304
        %326 = vmatpush.msra.mxu0 %v303
        %327 = vmatmul.f32.gmra.mxu0 %v309
        %v328 = vpop.f32.mrf.mxu0
        %v329 = vadd.f32 0.0, %v328
        %330 = vdwg.mxu0
        %vm331 = vcmask 64512
        %v332 = vsel %vm331, %v329, 0.0
        %v333 = vlaneseq
        %v334 = vshrl.u32 %v333, 7
        %336 = vrot.lane.b32.xlu0 %v332, 113
        %v337 = vpop.permute.xlu0 %336
        %339 = vrot.lane.b32.xlu0 %v332, 1
        %v340 = vpop.permute.xlu0 %339
        %vm342 = vcmask 7168
        %v343 = vsel %vm342, %v337, %v340
        %v344 = vand.u32 %v334, 1
        %vm345 = vcmp.ne.s32.totalorder %v344, 0
        %v346 = vsel %vm345, %v343, %v332
        %348 = vrot.lane.b32.xlu0 %v346, 114
        %v349 = vpop.permute.xlu0 %348
        %351 = vrot.lane.b32.xlu0 %v346, 2
        %v352 = vpop.permute.xlu0 %351
        %vm354 = vcmask 15360
        %v355 = vsel %vm354, %v349, %v352
        %v356 = vand.u32 %v334, 2
        %vm357 = vcmp.ne.s32.totalorder %v356, 0
        %v358 = vsel %vm357, %v355, %v346
        %360 = vrot.lane.b32.xlu0 %v358, 116
        %v361 = vpop.permute.xlu0 %360
        %363 = vrot.lane.b32.xlu0 %v358, 4
        %v364 = vpop.permute.xlu0 %363
        %vm366 = vcmask 31744
        %v367 = vsel %vm366, %v361, %v364
        %v368 = vand.u32 %v334, 4
        %vm369 = vcmp.ne.s32.totalorder %v368, 0
        %v370 = vsel %vm369, %v367, %v358
        %v371 = vlaneseq
        %v372 = vand.u32 %v371, 127
        %vm373 = vcmp.ge.s32.totalorder %v372, %v334
        %v374 = vadd.s32 %v334, 8
        %vm375 = vcmp.lt.s32.totalorder %v372, %v374
        %vm376 = vmand %vm373, %vm375
        %v378 = vsel %vm307, %v298, 0
        %v381 = vsel %vm307, %v299, 0
        %383 = vmatpush.xpose.msra.mxu0 0.0
        %384 = vmatpush.xpose.msra.mxu0 0.0
        %385 = vmatpush.xpose.msra.mxu0 0.0
        %386 = vmatpush.xpose.msra.mxu0 0.0
        %387 = vmatpush.xpose.msra.mxu0 0.0
        %388 = vmatpush.xpose.msra.mxu0 0.0
        %389 = vmatpush.xpose.msra.mxu0 0.0
        %390 = vmatpush.xpose.msra.mxu0 0.0
        %391 = vmatpush.xpose.msra.mxu0 0.0
        %392 = vmatpush.xpose.msra.mxu0 0.0
        %393 = vmatpush.xpose.msra.mxu0 0.0
        %394 = vmatpush.xpose.msra.mxu0 0.0
        %395 = vmatpush.xpose.msra.mxu0 0.0
        %396 = vmatpush.xpose.msra.mxu0 0.0
        %397 = vmatpush.xpose.msra.mxu0 %v381
        %398 = vmatpush.xpose.msra.mxu0 %v378
        %399 = vmatmul.f32.gmra.mxu0 %v309
        %v400 = vpop.f32.mrf.mxu0
        %v401 = vadd.f32 %v370, %v400
        %402 = vdwg.mxu0
        %v403 = vsel %vm376, %v401, -1e+30
        %vm404 = vcmask 130048
        %v405 = vsel %vm404, %v403, -inf
        %406 = vmax.xlane.f32.xlu0 %v405
        %v407 = vpop.xlane.xlu0 %406
        %v408 = vsub.f32 %v403, %v407
        %v409 = vmul.f32 %v408, 1.442695
        %v410 = vpow.pop %v409
        %v411 = vsel %vm404, %v410, 0.0
        %412 = vadd.xlane.f32.xlu0 %v411
        %v413 = vpop.xlane.xlu0 %412
        %v414 = vrcp.pop %v413
        %v415 = vmul.f32 %v410, %v414
        %v417 = vsel %vm404, %v415, 0
        %419 = vmatpush.msra.mxu0 0.0
        %420 = vmatpush.msra.mxu0 0.0
        %421 = vmatpush.msra.mxu0 0.0
        %422 = vmatpush.msra.mxu0 0.0
        %423 = vmatpush.msra.mxu0 0.0
        %424 = vmatpush.msra.mxu0 0.0
        %425 = vmatpush.msra.mxu0 0.0
        %426 = vmatpush.msra.mxu0 0.0
        %427 = vmatpush.msra.mxu0 0.0
        %428 = vmatpush.msra.mxu0 0.0
        %429 = vmatpush.msra.mxu0 0.0
        %430 = vmatpush.msra.mxu0 0.0
        %431 = vmatpush.msra.mxu0 0.0
        %432 = vmatpush.msra.mxu0 0.0
        %433 = vmatpush.msra.mxu0 %v302
        %434 = vmatpush.msra.mxu0 %v301
        %435 = vmatmul.f32.gmra.mxu0 %v417
        %v436 = vpop.f32.mrf.mxu0
        %v437 = vadd.f32 0.0, %v436
        %438 = vdwg.mxu0
        %439 = vst.msk [vmem:[%s288] sm:$0xff] %vm307, %v437
        %s440 = sand.u32 %s147, 1
        %s441 = scalar_lea.sflag [#allocation4], %s440
        %s442 = sand.u32 %s147, 1
        %s443 = smul.addr %s442, 8
        %s444 = scalar_lea.vmem [#allocation7], %s443
        // Predicated region
        $region45: #{tpu_custom_call.1} parent=35 // pred_check
          %p445 = pneg %p157
        $region46: #{tpu_custom_call.1} parent=35 // pred_check_branch
          %447 = sbr.rel (%p445) target = $region48
        $region47: #{tpu_custom_call.1} parent=35 // pred_region
          %449 = vsyncadd %s441, 0
          %s450 = sadd.s32 %s29, %s28
          %s451 = smul.addr %s450, 8
          %s452 = scalar_lea.hbm %s4, %s451
          %s454 = sshll.u32 %s444, 4
          %s455 = int_to_ptr.vmem [resolvable:$true] %s454
          %s456 = sshll.u32 %s452, 4
          %s457 = int_to_ptr.hbm [resolvable:$true] %s456
          %459 = dma.vmem_to_hbm [thread:$0]  %s455, 128, %s457, %s441
        $region48: #{tpu_custom_call.1} parent=35 // pred_fallthru
          _
      $region36: #{tpu_custom_call.1} parent=5 // pred_fallthru
        _
      %p460 = scmp.le.s32.totalorder 2, %s19
      // Predicated region
      $region49: #{tpu_custom_call.1} parent=5 // pred_check
        %p461 = pneg %p460
      $region50: #{tpu_custom_call.1} parent=5 // pred_check_branch
        %463 = sbr.rel (%p461) target = $region52
      $region51: #{tpu_custom_call.1} parent=5 // pred_region
        %s464 = ssub.s32 %s19, 2
        // Predicated region
        $region53: #{tpu_custom_call.1} parent=51 // pred_check
          %p465 = pneg %p163
        $region54: #{tpu_custom_call.1} parent=51 // pred_check_branch
          %467 = sbr.rel (%p465) target = $region56
        $region55: #{tpu_custom_call.1} parent=51 // pred_region
          %s468 = sand.u32 %s148, 1
          %s469 = scalar_lea.sflag [#allocation4], %s468
          %s470 = sand.u32 %s148, 1
          %s471 = smul.addr %s470, 8
          %s472 = scalar_lea.vmem [#allocation7], %s471
          %474 = dma.done %s469, 128
        $region56: #{tpu_custom_call.1} parent=51 // pred_fallthru
          _
      $region52: #{tpu_custom_call.1} parent=5 // pred_fallthru
        _
    $region6: #{tpu_custom_call.1} parent=1 // loop_footer
      %s23 = sadd.s32 1, %s19
    $region7: #{tpu_custom_call.1} parent=1 // loop_footer_branch
      %18 = sbr.rel target = $region3
    $region8: #{tpu_custom_call.1} parent=1 // loop_exit
      _
    %475 = vsyncpa [#allocation3], 1
    %s476 = scalar_lea.sflag [#allocation3], 1
    %477 = vsyncpa %s476, 1
    %478 = vsyncpa [#allocation6], 1
    %s479 = scalar_lea.sflag [#allocation6], 1
    %480 = vsyncpa %s479, 1
    %481 = vsyncpa [#allocation4], 1
    %s482 = scalar_lea.sflag [#allocation4], 1
    %483 = vsyncpa %s482, 1

</llo_original>
